<compile_context>
chip_gen: v7x
topology: tpu7x:2x2x1
jax: 0.10.0
libtpu: 0.0.40
codegen_flags: <defaults>
</compile_context>

<pallas_src>
import jax
import jax.numpy as jnp
from jax import lax
from jax.experimental import pallas as pl
from jax.experimental.pallas import tpu as pltpu


def conv_add_kernel(p_ref, x_ref, o_ref, out_ref):
    # p_ref  : (8,)            f32 SMEM  [w1, b1, w2_00, w2_01, w2_10, w2_11, b2_0, b2_1]
    # x_ref  : (N, 1, 16, 16)  f32 VMEM  conv input (channel squeezed in-kernel)
    # o_ref  : (N, 2, 16, 16)  f32 VMEM  stride-2 sampled conv2 input
    # out_ref: (N, 2, 18, 18)  f32 VMEM
    w1 = p_ref[0]
    b1 = p_ref[1]
    w2_00 = p_ref[2]
    w2_01 = p_ref[3]
    w2_10 = p_ref[4]
    w2_11 = p_ref[5]
    b2_0 = p_ref[6]
    b2_1 = p_ref[7]

    n, _, H, W = out_ref.shape

    # Channel squeeze of x1 and channel split of o: leading-dim indexing, free.
    x = x_ref[:, 0]                 # (N, 16, 16)
    o0 = o_ref[:, 0]                # (N, 16, 16)
    o1 = o_ref[:, 1]                # (N, 16, 16)

    # Interior math (VPU scalar-broadcast FMAs only).
    v1 = x * w1 + b1                            # conv : 1->1 ch == scale + bias
    y0 = o0 * w2_00 + o1 * w2_01 + b2_0         # conv2 out channel 0
    y1 = o0 * w2_10 + o1 * w2_11 + b2_1         # conv2 out channel 1

    # Border pixels: both convs only see zero padding there, so the output is
    # the per-channel constant b1 + b2[c].  Fill whole planes with the
    # constant, then overwrite the 16x16 interior.
    out_ref[:, 0] = jnp.full((n, H, W), b1 + b2_0, dtype=out_ref.dtype)
    out_ref[:, 1] = jnp.full((n, H, W), b1 + b2_1, dtype=out_ref.dtype)
    out_ref[:, 0, 1:H - 1, 1:W - 1] = v1 + y0   # v1 (1 ch) broadcasts over
    out_ref[:, 1, 1:H - 1, 1:W - 1] = v1 + y1   # both output channels


def pack_params(w1, b1, w2, b2):
    """Build the (8,) SMEM parameter vector ONCE, outside the jitted hot path."""
    return jnp.concatenate(
        [jnp.ravel(w1), jnp.ravel(b1), jnp.ravel(w2), jnp.ravel(b2)]
    ).astype(jnp.float32)


@jax.jit
def model_forward(params, x1, other):
    """params: (8,) f32, x1: (N,1,16,16) f32, other: (N,2,32,32) f32 -> (N,2,18,18) f32."""
    N, _, H_in, W_in = x1.shape
    # conv1 (k=1, s=1, p=1) output size.
    H_out, W_out = H_in + 2, W_in + 2
    # conv2 (k=1, s=2, p=2) output size must match conv1's for the add.
    H2 = (other.shape[2] + 2 * 2 - 1) // 2 + 1
    W2 = (other.shape[3] + 2 * 2 - 1) // 2 + 1
    assert (H2, W2) == (H_out, W_out), ((H2, W2), (H_out, W_out))

    # conv2 only ever samples other[..., ::2, ::2]; everything else of its
    # padded grid lands in the constant border.  Single slice HLO, fused into
    # the pallas call via allow_input_fusion below.
    o = other[:, :, ::2, ::2]                   # (N, 2, 16, 16)
    assert o.shape == (N, 2, H_in, W_in), o.shape

    return pl.pallas_call(
        conv_add_kernel,
        out_shape=jax.ShapeDtypeStruct((N, 2, H_out, W_out), jnp.float32),
        in_specs=[
            pl.BlockSpec(memory_space=pltpu.MemorySpace.SMEM),   # params
            pl.BlockSpec(memory_space=pltpu.MemorySpace.VMEM),   # x1 (whole)
            pl.BlockSpec(memory_space=pltpu.MemorySpace.VMEM),   # o (sliced other)
        ],
        out_specs=pl.BlockSpec(memory_space=pltpu.MemorySpace.VMEM),
        compiler_params=pltpu.CompilerParams(
            allow_input_fusion=[False, False, True],
        ),
    )(params, x1, o)


def reference_forward(x1, other, w1, b1, w2, b2):
    """Pure-JAX reference using lax conv (mirrors the PyTorch module)."""
    w1_full = w1.reshape(1, 1, 1, 1)
    v1 = lax.conv_general_dilated(
        x1, w1_full, window_strides=(1, 1), padding=[(1, 1), (1, 1)],
        dimension_numbers=("NCHW", "OIHW", "NCHW"))
    v1 = v1 + b1.reshape(1, 1, 1, 1)
    w2_full = w2.reshape(2, 2, 1, 1)
    y1 = lax.conv_general_dilated(
        other, w2_full, window_strides=(2, 2), padding=[(2, 2), (2, 2)],
        dimension_numbers=("NCHW", "OIHW", "NCHW"))
    y1 = y1 + b2.reshape(1, 2, 1, 1)
    return v1 + y1


if __name__ == "__main__":
    key = jax.random.PRNGKey(0)
    k_x, k_o, k_w1, k_b1, k_w2, k_b2 = jax.random.split(key, 6)

    # Small shapes consistent with the forward pass:
    #   x1:    (2, 1, 16, 16) -> v1: (2, 1, 18, 18)   (k=1, stride=1, pad=1)
    #   other: (2, 2, 32, 32) -> y1: (2, 2, 18, 18)   (k=1, stride=2, pad=2)
    x1 = jax.random.normal(k_x, (2, 1, 16, 16), dtype=jnp.float32)
    other = jax.random.normal(k_o, (2, 2, 32, 32), dtype=jnp.float32)

    # Deterministic synthetic parameters (Conv2d default has bias=True).
    w1 = jax.random.normal(k_w1, (1, 1, 1, 1), dtype=jnp.float32)  # conv weight
    b1 = jax.random.normal(k_b1, (1,), dtype=jnp.float32)          # conv bias
    w2 = jax.random.normal(k_w2, (2, 2, 1, 1), dtype=jnp.float32)  # conv2 weight [co,ci,1,1]
    b2 = jax.random.normal(k_b2, (2,), dtype=jnp.float32)          # conv2 bias

    # Pack scalar params once, outside the jitted hot path.
    params = jax.block_until_ready(pack_params(w1, b1, w2, b2))

    out = jax.block_until_ready(model_forward(params, x1, other))

    ref = reference_forward(x1, other, w1, b1, w2, b2)
    assert out.shape == (2, 2, 18, 18), out.shape
    assert jnp.allclose(out, ref, atol=1e-5, rtol=1e-5), "mismatch vs reference"

    print("KERNEL_OK")
</pallas_src>

<mosaic_0001>
module attributes {stable_mosaic.version = 11 : i64} {
  func.func @conv_add_kernel(%arg0: memref<8xf32, #tpu.memory_space<smem>>, %arg1: memref<2x1x16x16xf32, #tpu.memory_space<vmem>>, %arg2: memref<2x2x16x16xf32, #tpu.memory_space<vmem>>, %arg3: memref<2x2x18x18xf32, #tpu.memory_space<vmem>>) attributes {dimension_semantics = [], scalar_prefetch = 0 : i64, scratch_operands = 0 : i64, tpu.core_type = #tpu.core_type<tc>} {
    %c0 = arith.constant 0 : index
    %0 = memref.load %arg0[%c0] : memref<8xf32, #tpu.memory_space<smem>>
    %c1 = arith.constant 1 : index
    %1 = memref.load %arg0[%c1] : memref<8xf32, #tpu.memory_space<smem>>
    %c2 = arith.constant 2 : index
    %2 = memref.load %arg0[%c2] : memref<8xf32, #tpu.memory_space<smem>>
    %c3 = arith.constant 3 : index
    %3 = memref.load %arg0[%c3] : memref<8xf32, #tpu.memory_space<smem>>
    %c4 = arith.constant 4 : index
    %4 = memref.load %arg0[%c4] : memref<8xf32, #tpu.memory_space<smem>>
    %c5 = arith.constant 5 : index
    %5 = memref.load %arg0[%c5] : memref<8xf32, #tpu.memory_space<smem>>
    %c6 = arith.constant 6 : index
    %6 = memref.load %arg0[%c6] : memref<8xf32, #tpu.memory_space<smem>>
    %c7 = arith.constant 7 : index
    %7 = memref.load %arg0[%c7] : memref<8xf32, #tpu.memory_space<smem>>
    %c0_0 = arith.constant 0 : index
    %c0_1 = arith.constant 0 : index
    %c0_2 = arith.constant 0 : index
    %c0_3 = arith.constant 0 : index
    %8 = vector.load %arg1[%c0_0, %c0_1, %c0_2, %c0_3] : memref<2x1x16x16xf32, #tpu.memory_space<vmem>>, vector<2x1x16x16xf32>
    %9 = vector.shape_cast %8 : vector<2x1x16x16xf32> to vector<2x16x16xf32>
    %c0_4 = arith.constant 0 : index
    %c0_5 = arith.constant 0 : index
    %c0_6 = arith.constant 0 : index
    %c0_7 = arith.constant 0 : index
    %10 = vector.load %arg2[%c0_4, %c0_5, %c0_6, %c0_7] : memref<2x2x16x16xf32, #tpu.memory_space<vmem>>, vector<2x1x16x16xf32>
    %11 = vector.shape_cast %10 : vector<2x1x16x16xf32> to vector<2x16x16xf32>
    %c0_8 = arith.constant 0 : index
    %c1_9 = arith.constant 1 : index
    %c0_10 = arith.constant 0 : index
    %c0_11 = arith.constant 0 : index
    %12 = vector.load %arg2[%c0_8, %c1_9, %c0_10, %c0_11] : memref<2x2x16x16xf32, #tpu.memory_space<vmem>>, vector<2x1x16x16xf32>
    %13 = vector.shape_cast %12 : vector<2x1x16x16xf32> to vector<2x16x16xf32>
    %14 = vector.broadcast %0 : f32 to vector<2x16x16xf32>
    %15 = arith.mulf %9, %14 : vector<2x16x16xf32>
    %16 = vector.broadcast %1 : f32 to vector<2x16x16xf32>
    %17 = arith.addf %15, %16 : vector<2x16x16xf32>
    %18 = vector.broadcast %2 : f32 to vector<2x16x16xf32>
    %19 = arith.mulf %11, %18 : vector<2x16x16xf32>
    %20 = vector.broadcast %3 : f32 to vector<2x16x16xf32>
    %21 = arith.mulf %13, %20 : vector<2x16x16xf32>
    %22 = arith.addf %19, %21 : vector<2x16x16xf32>
    %23 = vector.broadcast %6 : f32 to vector<2x16x16xf32>
    %24 = arith.addf %22, %23 : vector<2x16x16xf32>
    %25 = vector.broadcast %4 : f32 to vector<2x16x16xf32>
    %26 = arith.mulf %11, %25 : vector<2x16x16xf32>
    %27 = vector.broadcast %5 : f32 to vector<2x16x16xf32>
    %28 = arith.mulf %13, %27 : vector<2x16x16xf32>
    %29 = arith.addf %26, %28 : vector<2x16x16xf32>
    %30 = vector.broadcast %7 : f32 to vector<2x16x16xf32>
    %31 = arith.addf %29, %30 : vector<2x16x16xf32>
    %32 = arith.addf %1, %6 : f32
    %33 = vector.broadcast %32 : f32 to vector<2x18x18xf32>
    %c0_12 = arith.constant 0 : index
    %c0_13 = arith.constant 0 : index
    %c0_14 = arith.constant 0 : index
    %c0_15 = arith.constant 0 : index
    %34 = vector.load %arg3[%c0_12, %c0_13, %c0_14, %c0_15] : memref<2x2x18x18xf32, #tpu.memory_space<vmem>>, vector<2x1x18x18xf32>
    %35 = vector.shape_cast %34 : vector<2x1x18x18xf32> to vector<2x18x18xf32>
    %36 = vector.shape_cast %33 : vector<2x18x18xf32> to vector<2x1x18x18xf32>
    tpu.vector_store %arg3[%c0_12, %c0_13, %c0_14, %c0_15], %36 {strides = array<i32>} : memref<2x2x18x18xf32, #tpu.memory_space<vmem>>, vector<2x1x18x18xf32>,
    %37 = arith.addf %1, %7 : f32
    %38 = vector.broadcast %37 : f32 to vector<2x18x18xf32>
    %c0_16 = arith.constant 0 : index
    %c1_17 = arith.constant 1 : index
    %c0_18 = arith.constant 0 : index
    %c0_19 = arith.constant 0 : index
    %39 = vector.load %arg3[%c0_16, %c1_17, %c0_18, %c0_19] : memref<2x2x18x18xf32, #tpu.memory_space<vmem>>, vector<2x1x18x18xf32>
    %40 = vector.shape_cast %39 : vector<2x1x18x18xf32> to vector<2x18x18xf32>
    %41 = vector.shape_cast %38 : vector<2x18x18xf32> to vector<2x1x18x18xf32>
    tpu.vector_store %arg3[%c0_16, %c1_17, %c0_18, %c0_19], %41 {strides = array<i32>} : memref<2x2x18x18xf32, #tpu.memory_space<vmem>>, vector<2x1x18x18xf32>,
    %42 = arith.addf %17, %24 : vector<2x16x16xf32>
    %c0_20 = arith.constant 0 : index
    %c0_21 = arith.constant 0 : index
    %c1_22 = arith.constant 1 : index
    %c1_23 = arith.constant 1 : index
    %43 = vector.load %arg3[%c0_20, %c0_21, %c1_22, %c1_23] : memref<2x2x18x18xf32, #tpu.memory_space<vmem>>, vector<2x1x16x16xf32>
    %44 = vector.shape_cast %43 : vector<2x1x16x16xf32> to vector<2x16x16xf32>
    %45 = vector.shape_cast %42 : vector<2x16x16xf32> to vector<2x1x16x16xf32>
    tpu.vector_store %arg3[%c0_20, %c0_21, %c1_22, %c1_23], %45 {strides = array<i32>} : memref<2x2x18x18xf32, #tpu.memory_space<vmem>>, vector<2x1x16x16xf32>,
    %46 = arith.addf %17, %31 : vector<2x16x16xf32>
    %c0_24 = arith.constant 0 : index
    %c1_25 = arith.constant 1 : index
    %c1_26 = arith.constant 1 : index
    %c1_27 = arith.constant 1 : index
    %47 = vector.load %arg3[%c0_24, %c1_25, %c1_26, %c1_27] : memref<2x2x18x18xf32, #tpu.memory_space<vmem>>, vector<2x1x16x16xf32>
    %48 = vector.shape_cast %47 : vector<2x1x16x16xf32> to vector<2x16x16xf32>
    %49 = vector.shape_cast %46 : vector<2x16x16xf32> to vector<2x1x16x16xf32>
    tpu.vector_store %arg3[%c0_24, %c1_25, %c1_26, %c1_27], %49 {strides = array<i32>} : memref<2x2x18x18xf32, #tpu.memory_space<vmem>>, vector<2x1x16x16xf32>,
    return
  }
}

</mosaic_0001>

<llo_original>
// kernel: model_forward.1
$region0: #{model_forward.1}
  #allocation0 [shape = 'u32[]', space=smem, size = 0x4, offset = 0x4, fixed_abs, tag = 'smem constant byte address 0x4 - core index']
  #allocation1 [shape = 'u32[144,128]{1,0:T(1,128)}', space=vmem, size = 0x12000, scoped, tag = 'internal scratch']
  %s0 = inlined_call_operand.vmem [shape: f32[8], index: 0, kind: input, shape index: {}]
  %s1 = inlined_call_operand.vmem [shape: f32[2,1,16,16], index: 1, kind: input, shape index: {}]
  %s2 = inlined_call_operand.vmem [shape: f32[2,2,16,16], index: 2, kind: input, shape index: {}]
  %s3 = inlined_call_operand.vmem [shape: f32[2,2,18,18], index: 3, kind: output, shape index: {}]
  %s4 = sld [smem:[#allocation0]]
  $region26: #{model_forward.1} parent=0
    _
  %s6 = ssub.s32 1, %s4
  %s7 = scalar_select 0, %s6, %s4
  $region1: #{model_forward.1} parent=0
    #allocation2 [shape = 'u8[512]{0}', space=smem, size = 0x200, scoped, tag = 'input window, operand 0, single buffered']
    #allocation3 [shape = 's32[1]{0}', space=sflag, size = 0x4, scoped, tag = 'scoped memory for model_forward.1']
    %8 = vsyncpa [#allocation3], 0
    // Predicated region
    $region2: #{model_forward.1} parent=1 // pred_check
      _
    $region3: #{model_forward.1} parent=1 // pred_check_branch
      %10 = sbr.rel (0) target = $region5
    $region4: #{model_forward.1} parent=1 // pred_region
      %s12 = ssub.s32 16, 16
      %13 = vsyncadd [#allocation3], %s12
      %s15 = sshll.u32 %s0, 4
      %s16 = int_to_ptr.vmem [resolvable:$true] %s15
      %18 = dma.vmem_to_smem %s16, 16, [#allocation2], [#allocation3]
    $region5: #{model_forward.1} parent=1 // pred_fallthru
      _
    // Predicated region
    $region6: #{model_forward.1} parent=1 // pred_check
      _
    $region7: #{model_forward.1} parent=1 // pred_check_branch
      %20 = sbr.rel (0) target = $region9
    $region8: #{model_forward.1} parent=1 // pred_region
      _
    $region9: #{model_forward.1} parent=1 // pred_fallthru
      _
    // Predicated region
    $region10: #{model_forward.1} parent=1 // pred_check
      _
    $region11: #{model_forward.1} parent=1 // pred_check_branch
      %22 = sbr.rel (0) target = $region13
    $region12: #{model_forward.1} parent=1 // pred_region
      _
    $region13: #{model_forward.1} parent=1 // pred_fallthru
      _
    // Predicated region
    $region14: #{model_forward.1} parent=1 // pred_check
      _
    $region15: #{model_forward.1} parent=1 // pred_check_branch
      %24 = sbr.rel (0) target = $region17
    $region16: #{model_forward.1} parent=1 // pred_region
      %25 = dma.done [#allocation3], 16
    $region17: #{model_forward.1} parent=1 // pred_fallthru
      _
    %26 = sfence
    %s27 = sld [smem:[#allocation2]]
    %s28 = sld [smem:[#allocation2 + $0x1]]
    %s29 = sld [smem:[#allocation2 + $0x2]]
    %s30 = sld [smem:[#allocation2 + $0x3]]
    %s31 = sld [smem:[#allocation2 + $0x4]]
    %s32 = sld [smem:[#allocation2 + $0x5]]
    %s33 = sld [smem:[#allocation2 + $0x6]]
    %s34 = sld [smem:[#allocation2 + $0x7]]
    %v35 = vld [vmem:[%s1] sm:$0xff]
    %v36 = vld [vmem:[%s1 + $0x8] sm:$0xff]
    %v37 = vld [vmem:[%s1 + $0x10] sm:$0xff]
    %v38 = vld [vmem:[%s1 + $0x18] sm:$0xff]
    %v39 = vld [vmem:[%s2] sm:$0xff]
    %v40 = vld [vmem:[%s2 + $0x8] sm:$0xff]
    %v41 = vld [vmem:[%s2 + $0x20] sm:$0xff]
    %v42 = vld [vmem:[%s2 + $0x28] sm:$0xff]
    %s43 = scalar_lea.vmem %s2, 16
    %v44 = vld [vmem:[%s43] sm:$0xff]
    %v45 = vld [vmem:[%s43 + $0x8] sm:$0xff]
    %v46 = vld [vmem:[%s43 + $0x20] sm:$0xff]
    %v47 = vld [vmem:[%s43 + $0x28] sm:$0xff]
    %v48 = vstv %s27
    %v49 = vmul.f32 %v35, %v48
    %v50 = vmul.f32 %v36, %v48
    %v51 = vmul.f32 %v37, %v48
    %v52 = vmul.f32 %v38, %v48
    %v53 = vstv %s28
    %v54 = vadd.f32 %v49, %v53
    %v55 = vadd.f32 %v50, %v53
    %v56 = vadd.f32 %v51, %v53
    %v57 = vadd.f32 %v52, %v53
    %v58 = vstv %s29
    %v59 = vmul.f32 %v39, %v58
    %v60 = vmul.f32 %v40, %v58
    %v61 = vmul.f32 %v41, %v58
    %v62 = vmul.f32 %v42, %v58
    %v63 = vstv %s30
    %v64 = vmul.f32 %v44, %v63
    %v65 = vmul.f32 %v45, %v63
    %v66 = vmul.f32 %v46, %v63
    %v67 = vmul.f32 %v47, %v63
    %v68 = vadd.f32 %v59, %v64
    %v69 = vadd.f32 %v60, %v65
    %v70 = vadd.f32 %v61, %v66
    %v71 = vadd.f32 %v62, %v67
    %v72 = vstv %s33
    %v73 = vadd.f32 %v68, %v72
    %v74 = vadd.f32 %v69, %v72
    %v75 = vadd.f32 %v70, %v72
    %v76 = vadd.f32 %v71, %v72
    %v77 = vstv %s31
    %v78 = vmul.f32 %v39, %v77
    %v79 = vmul.f32 %v40, %v77
    %v80 = vmul.f32 %v41, %v77
    %v81 = vmul.f32 %v42, %v77
    %v82 = vstv %s32
    %v83 = vmul.f32 %v44, %v82
    %v84 = vmul.f32 %v45, %v82
    %v85 = vmul.f32 %v46, %v82
    %v86 = vmul.f32 %v47, %v82
    %v87 = vadd.f32 %v78, %v83
    %v88 = vadd.f32 %v79, %v84
    %v89 = vadd.f32 %v80, %v85
    %v90 = vadd.f32 %v81, %v86
    %v91 = vstv %s34
    %v92 = vadd.f32 %v87, %v91
    %v93 = vadd.f32 %v88, %v91
    %v94 = vadd.f32 %v89, %v91
    %v95 = vadd.f32 %v90, %v91
    %s96 = sadd.f32 %s28, %s33
    %v97 = vstv %s96
    %vm98 = vcmask 146432
    %99 = vst.msk [vmem:[%s3] sm:$0xff] %vm98, %v97
    %100 = vst.msk [vmem:[%s3 + $0x8] sm:$0xff] %vm98, %v97
    %vm101 = vcmask 140288
    %102 = vst.msk [vmem:[%s3 + $0x10] sm:$0x3] %vm101, %v97
    %103 = vst.msk [vmem:[%s3 + $0x30] sm:$0xff] %vm98, %v97
    %104 = vst.msk [vmem:[%s3 + $0x38] sm:$0xff] %vm98, %v97
    %105 = vst.msk [vmem:[%s3 + $0x40] sm:$0x3] %vm101, %v97
    %s106 = sadd.f32 %s28, %s34
    %v107 = vstv %s106
    %s108 = scalar_lea.vmem %s3, 24
    %109 = vst.msk [vmem:[%s108] sm:$0xff] %vm98, %v107
    %110 = vst.msk [vmem:[%s108 + $0x8] sm:$0xff] %vm98, %v107
    %111 = vst.msk [vmem:[%s108 + $0x10] sm:$0x3] %vm101, %v107
    %112 = vst.msk [vmem:[%s108 + $0x30] sm:$0xff] %vm98, %v107
    %113 = vst.msk [vmem:[%s108 + $0x38] sm:$0xff] %vm98, %v107
    %114 = vst.msk [vmem:[%s108 + $0x40] sm:$0x3] %vm101, %v107
    %v115 = vadd.f32 %v54, %v73
    %v116 = vadd.f32 %v55, %v74
    %v117 = vadd.f32 %v56, %v75
    %v118 = vadd.f32 %v57, %v76
    %123 = vrot.lane.b32.xlu0 %v115, 1
    %v124 = vpop.permute.xlu0 %123
    %125 = vrot.lane.b32.xlu0 %v116, 1
    %v126 = vpop.permute.xlu0 %125
    %127 = vrot.lane.b32.xlu0 %v117, 1
    %v128 = vpop.permute.xlu0 %127
    %129 = vrot.lane.b32.xlu0 %v118, 1
    %v130 = vpop.permute.xlu0 %129
    %vm135 = vcmask 138248
    %136 = vst.msk [vmem:[%s3 + $0x1] sm:$0xff] %vm135, %v124
    %137 = vst.msk [vmem:[%s3 + $0x9] sm:$0xff] %vm135, %v126
    %138 = vst.msk [vmem:[%s3 + $0x31] sm:$0xff] %vm135, %v128
    %139 = vst.msk [vmem:[%s3 + $0x39] sm:$0xff] %vm135, %v130
    %v140 = vadd.f32 %v54, %v92
    %v141 = vadd.f32 %v55, %v93
    %v142 = vadd.f32 %v56, %v94
    %v143 = vadd.f32 %v57, %v95
    %148 = vrot.lane.b32.xlu0 %v140, 1
    %v149 = vpop.permute.xlu0 %148
    %150 = vrot.lane.b32.xlu0 %v141, 1
    %v151 = vpop.permute.xlu0 %150
    %152 = vrot.lane.b32.xlu0 %v142, 1
    %v153 = vpop.permute.xlu0 %152
    %154 = vrot.lane.b32.xlu0 %v143, 1
    %v155 = vpop.permute.xlu0 %154
    %160 = vst.msk [vmem:[%s108 + $0x1] sm:$0xff] %vm135, %v149
    %161 = vst.msk [vmem:[%s108 + $0x9] sm:$0xff] %vm135, %v151
    %162 = vst.msk [vmem:[%s108 + $0x31] sm:$0xff] %vm135, %v153
    %163 = vst.msk [vmem:[%s108 + $0x39] sm:$0xff] %vm135, %v155
    // Predicated region
    $region18: #{model_forward.1} parent=1 // pred_check
      _
    $region19: #{model_forward.1} parent=1 // pred_check_branch
      %165 = sbr.rel (0) target = $region21
    $region20: #{model_forward.1} parent=1 // pred_region
      _
    $region21: #{model_forward.1} parent=1 // pred_fallthru
      _
    // Predicated region
    $region22: #{model_forward.1} parent=1 // pred_check
      _
    $region23: #{model_forward.1} parent=1 // pred_check_branch
      %167 = sbr.rel (0) target = $region25
    $region24: #{model_forward.1} parent=1 // pred_region
      _
    $region25: #{model_forward.1} parent=1 // pred_fallthru
      _
    %168 = vsyncpa [#allocation3], 1

</llo_original>
